<compile_context>
chip_gen: v7x
topology: tpu7x:2x2x1
jax: 0.10.0
libtpu: 0.0.40
codegen_flags: <defaults>
</compile_context>

<pallas_src>
import functools

import jax
import jax.numpy as jnp
from jax import lax
from jax.experimental import pallas as pl
from jax.experimental.pallas import tpu as pltpu

LANES = 128                      # vreg lane width
CHUNK_ROWS = 64                  # rows folded per inner-loop step (mult. of 16 for bf16)
MAIN_GRAIN = CHUNK_ROWS * LANES  # kernel handles a multiple of this many elements
MAX_TILE_ROWS = 4096             # (4096, 128) f32 tile = 2 MiB per input per buffer
NUM_CORE_SPLITS = 2              # leading "parallel" grid axis (both TCs on v7x)


def _accumulate_tile(pred_refs, t_ref, o_ref, chunks, masked, row_base, rows):
    """Fold one (tile_rows, 128) tile into the resident (CHUNK_ROWS, 128) output block."""
    if masked:
        # Hoisted out of the loop (JAX does not CSE broadcasts inside loops).
        iota = lax.broadcasted_iota(jnp.int32, (CHUNK_ROWS, LANES), 0)

    def chunk_body(k, acc):
        r0 = pl.multiple_of(k * CHUNK_ROWS, CHUNK_ROWS)
        sl = pl.ds(r0, CHUNK_ROWS)
        t = t_ref[sl, :].astype(jnp.float32)
        d = pred_refs[0][sl, :].astype(jnp.float32) - t
        s = d * d
        for p_ref in pred_refs[1:]:
            d = p_ref[sl, :].astype(jnp.float32) - t
            s = s + d * d
        if masked:
            # Zero rows past the true row count: covers the ragged last tile
            # (garbage rows read past the array end) and clamped duplicates.
            s = jnp.where(row_base + r0 + iota < rows, s, 0.0)
        return acc + s

    acc = lax.fori_loop(0, chunks, chunk_body,
                        jnp.zeros((CHUNK_ROWS, LANES), jnp.float32))
    o_ref[0] += acc


def _sse_kernel(*refs, num_preds, rows, tile_rows, steps_per_core):
    """Accumulate sum_p sum((pred_p - target)^2) into a per-core-split partial block."""
    pred_refs = refs[:num_preds]
    t_ref = refs[num_preds]
    o_ref = refs[num_preds + 1]

    c = pl.program_id(0)   # core-split ("parallel") axis
    i = pl.program_id(1)   # sequential reduction axis

    @pl.when(i == 0)
    def _():
        o_ref[...] = jnp.zeros_like(o_ref)

    tile_idx = c * steps_per_core + i          # UNCLAMPED tile index
    row_base = tile_idx * tile_rows
    chunks = tile_rows // CHUNK_ROWS

    # Fully in-range, non-duplicate tiles skip the mask entirely.
    is_interior = (tile_idx + 1) * tile_rows <= rows

    pl.when(is_interior)(
        lambda: _accumulate_tile(pred_refs, t_ref, o_ref, chunks, False, row_base, rows))
    pl.when(jnp.logical_not(is_interior))(
        lambda: _accumulate_tile(pred_refs, t_ref, o_ref, chunks, True, row_base, rows))


def _sum_sq_diff(preds, target, *, max_tile_rows=MAX_TILE_ROWS):
    """sum_p sum((p - target)^2) over all elements; bulk via one fused Pallas call."""
    assert max_tile_rows % CHUNK_ROWS == 0 and max_tile_rows > 0
    n = target.size
    flats = [p.reshape(-1) for p in preds]
    tflat = target.reshape(-1)

    n_main = (n // MAIN_GRAIN) * MAIN_GRAIN
    total = jnp.zeros((), jnp.float32)

    # Remainder (< 8192 elements): plain JAX, fused by XLA. Avoids padding or
    # block shapes larger than the array.
    if n_main != n:
        tt = tflat[n_main:].astype(jnp.float32)
        for f in flats:
            d = f[n_main:].astype(jnp.float32) - tt
            total = total + jnp.sum(d * d)

    if n_main == 0:
        return total

    rows = n_main // LANES                      # multiple of CHUNK_ROWS
    tile_rows = min(max_tile_rows, rows)        # multiple of CHUNK_ROWS, <= rows
    num_tiles = pl.cdiv(rows, tile_rows)
    splits = NUM_CORE_SPLITS if num_tiles >= 2 else 1
    steps_per_core = pl.cdiv(num_tiles, splits)

    def in_map(c, i):
        # Clamp so every grid step maps to a valid tile; clamped duplicates are
        # fully masked to zero inside the kernel (gate uses the UNCLAMPED index).
        return (jnp.minimum(c * steps_per_core + i, num_tiles - 1), 0)

    operands = []
    for f in flats + [tflat]:
        fm = f if n_main == n else f[:n_main]   # no-op when n is a MAIN_GRAIN multiple
        operands.append(fm.reshape(rows, LANES))

    num_preds = len(flats)
    kernel = functools.partial(
        _sse_kernel, num_preds=num_preds, rows=rows,
        tile_rows=tile_rows, steps_per_core=steps_per_core)

    in_bytes = sum(int(op.size) * op.dtype.itemsize for op in operands)
    out_bytes = splits * CHUNK_ROWS * LANES * 4

    partials = pl.pallas_call(
        kernel,
        out_shape=jax.ShapeDtypeStruct((splits, CHUNK_ROWS, LANES), jnp.float32),
        grid_spec=pltpu.PrefetchScalarGridSpec(
            num_scalar_prefetch=0,
            grid=(splits, steps_per_core),
            in_specs=[pl.BlockSpec((tile_rows, LANES), in_map)
                      for _ in range(num_preds + 1)],
            out_specs=pl.BlockSpec((1, CHUNK_ROWS, LANES), lambda c, i: (c, 0, 0)),
        ),
        compiler_params=pltpu.CompilerParams(
            dimension_semantics=("parallel", "arbitrary"),
            vmem_limit_bytes=32 * 1024 * 1024,
        ),
        cost_estimate=pl.CostEstimate(
            flops=3 * num_preds * n_main,
            transcendentals=0,
            bytes_accessed=int(in_bytes + out_bytes),
        ),
    )(*operands)

    # Final tiny cross-lane reduce of the partial-sum slab in plain JAX.
    return total + jnp.sum(partials)


def mse_loss(inputs, targets, *, max_tile_rows=MAX_TILE_ROWS):
    """Matches MSELoss.forward: mean MSE on rgb_coarse, plus rgb_fine if present."""
    preds = [inputs["rgb_coarse"]]
    if "rgb_fine" in inputs:
        preds.append(inputs["rgb_fine"])
    # (SSD_coarse + SSD_fine) / n == mean(coarse) + mean(fine): same divisor n.
    ssd = _sum_sq_diff(preds, targets, max_tile_rows=max_tile_rows)
    return ssd / jnp.float32(targets.size)


if __name__ == "__main__":
    key = jax.random.PRNGKey(0)
    k1, k2, k3, k4, k5 = jax.random.split(key, 5)

    # Test 1: coarse + fine, default tiles. Exercises the fused 3-input kernel
    # (one full interior tile) plus the plain-JAX remainder path.
    n_rays = 4096
    rgb_coarse = jax.random.uniform(k1, (n_rays, 3), dtype=jnp.float32)
    rgb_fine = jax.random.uniform(k2, (n_rays, 3), dtype=jnp.float32)
    targets = jax.random.uniform(k3, (n_rays, 3), dtype=jnp.float32)

    inputs = {"rgb_coarse": rgb_coarse, "rgb_fine": rgb_fine}
    loss = jax.block_until_ready(mse_loss(inputs, targets))
    ref = jnp.mean((rgb_coarse - targets) ** 2) + jnp.mean((rgb_fine - targets) ** 2)
    assert jnp.allclose(loss, ref, rtol=1e-5, atol=1e-5), (loss, ref)

    # Test 2: coarse-only, small forced tiles -> multi-tile grid with a 2-way
    # core split, a masked ragged last tile, and a masked clamped-duplicate tile.
    x = jax.random.normal(k4, (13667, 3), dtype=jnp.float32)
    t2 = jax.random.normal(k5, (13667, 3), dtype=jnp.float32)
    loss2 = jax.block_until_ready(mse_loss({"rgb_coarse": x}, t2, max_tile_rows=128))
    ref2 = jnp.mean((x - t2) ** 2)
    assert jnp.allclose(loss2, ref2, rtol=1e-5, atol=1e-5), (loss2, ref2)

    print("KERNEL_OK")
</pallas_src>

<mosaic_0001>
module attributes {stable_mosaic.version = 11 : i64} {
  func.func @_sse_kernel(%arg0: i32, %arg1: i32, %arg2: memref<64x128xf32, #tpu.memory_space<vmem>>, %arg3: memref<64x128xf32, #tpu.memory_space<vmem>>, %arg4: memref<64x128xf32, #tpu.memory_space<vmem>>, %arg5: memref<1x64x128xf32, #tpu.memory_space<vmem>>) attributes {dimension_semantics = [#tpu.dimension_semantics<parallel>, #tpu.dimension_semantics<arbitrary>], iteration_bounds = array<i64: 1, 1>, scalar_prefetch = 0 : i64, scratch_operands = 0 : i64, tpu.core_type = #tpu.core_type<tc>, window_params = [{transform_indices = @transform_0, window_bounds = array<i64: 64, 128>}, {transform_indices = @transform_1, window_bounds = array<i64: 64, 128>}, {transform_indices = @transform_2, window_bounds = array<i64: 64, 128>}, {transform_indices = @transform_3, window_bounds = array<i64: 1, 64, 128>}]} {
    %c0_i32 = arith.constant 0 : i32
    %0 = arith.cmpi eq, %arg1, %c0_i32 : i32
    %1 = arith.extui %0 : i1 to i32
    %c0_i32_0 = arith.constant 0 : i32
    %2 = arith.cmpi ne, %1, %c0_i32_0 : i32
    scf.if %2 {
      %cst = arith.constant 0.000000e+00 : f32
      %14 = vector.broadcast %cst : f32 to vector<1x64x128xf32>
      %c0 = arith.constant 0 : index
      %c0_6 = arith.constant 0 : index
      %c0_7 = arith.constant 0 : index
      %15 = vector.load %arg5[%c0, %c0_6, %c0_7] : memref<1x64x128xf32, #tpu.memory_space<vmem>>, vector<1x64x128xf32>
      tpu.vector_store %arg5[%c0, %c0_6, %c0_7], %14 {strides = array<i32>} : memref<1x64x128xf32, #tpu.memory_space<vmem>>, vector<1x64x128xf32>,
    } else {
    }
    %c1_i32 = arith.constant 1 : i32
    %3 = arith.muli %arg0, %c1_i32 : i32
    %4 = arith.addi %3, %arg1 : i32
    %c64_i32 = arith.constant 64 : i32
    %5 = arith.muli %4, %c64_i32 : i32
    %c1_i32_1 = arith.constant 1 : i32
    %6 = arith.addi %4, %c1_i32_1 : i32
    %c64_i32_2 = arith.constant 64 : i32
    %7 = arith.muli %6, %c64_i32_2 : i32
    %c64_i32_3 = arith.constant 64 : i32
    %8 = arith.cmpi sle, %7, %c64_i32_3 : i32
    %9 = arith.extui %8 : i1 to i32
    %c0_i32_4 = arith.constant 0 : i32
    %10 = arith.cmpi ne, %9, %c0_i32_4 : i32
    scf.if %10 {
      %cst = arith.constant 0.000000e+00 : f32
      %14 = vector.broadcast %cst : f32 to vector<64x128xf32>
      %c0_i32_6 = arith.constant 0 : i32
      %c64_i32_7 = arith.constant 64 : i32
      %15 = arith.muli %c0_i32_6, %c64_i32_7 : i32
      %16 = tpu.assume_multiple %15, 64 : i32
      %17 = arith.index_cast %16 : i32 to index
      %c0 = arith.constant 0 : index
      %18 = vector.load %arg4[%17, %c0] : memref<64x128xf32, #tpu.memory_space<vmem>>, vector<64x128xf32>
      %19 = arith.index_cast %16 : i32 to index
      %c0_8 = arith.constant 0 : index
      %20 = vector.load %arg2[%19, %c0_8] : memref<64x128xf32, #tpu.memory_space<vmem>>, vector<64x128xf32>
      %21 = arith.subf %20, %18 : vector<64x128xf32>
      %22 = arith.mulf %21, %21 : vector<64x128xf32>
      %23 = arith.index_cast %16 : i32 to index
      %c0_9 = arith.constant 0 : index
      %24 = vector.load %arg3[%23, %c0_9] : memref<64x128xf32, #tpu.memory_space<vmem>>, vector<64x128xf32>
      %25 = arith.subf %24, %18 : vector<64x128xf32>
      %26 = arith.mulf %25, %25 : vector<64x128xf32>
      %27 = arith.addf %22, %26 : vector<64x128xf32>
      %28 = arith.addf %14, %27 : vector<64x128xf32>
      %c1_i32_10 = arith.constant 1 : i32
      %c0_11 = arith.constant 0 : index
      %c0_12 = arith.constant 0 : index
      %c0_13 = arith.constant 0 : index
      %29 = vector.load %arg5[%c0_11, %c0_12, %c0_13] : memref<1x64x128xf32, #tpu.memory_space<vmem>>, vector<1x64x128xf32>
      %30 = vector.shape_cast %29 : vector<1x64x128xf32> to vector<64x128xf32>
      %31 = arith.addf %30, %28 : vector<64x128xf32>
      %c0_14 = arith.constant 0 : index
      %c0_15 = arith.constant 0 : index
      %c0_16 = arith.constant 0 : index
      %32 = vector.load %arg5[%c0_14, %c0_15, %c0_16] : memref<1x64x128xf32, #tpu.memory_space<vmem>>, vector<1x64x128xf32>
      %33 = vector.shape_cast %32 : vector<1x64x128xf32> to vector<64x128xf32>
      %34 = vector.shape_cast %31 : vector<64x128xf32> to vector<1x64x128xf32>
      tpu.vector_store %arg5[%c0_14, %c0_15, %c0_16], %34 {strides = array<i32>} : memref<1x64x128xf32, #tpu.memory_space<vmem>>, vector<1x64x128xf32>,
    } else {
    }
    %true = arith.constant true
    %11 = arith.xori %8, %true : i1
    %12 = arith.extui %11 : i1 to i32
    %c0_i32_5 = arith.constant 0 : i32
    %13 = arith.cmpi ne, %12, %c0_i32_5 : i32
    scf.if %13 {
      %14 = tpu.iota {dimensions = array<i32: 0>} : vector<64x128xi32>
      %cst = arith.constant 0.000000e+00 : f32
      %15 = vector.broadcast %cst : f32 to vector<64x128xf32>
      %c0_i32_6 = arith.constant 0 : i32
      %c64_i32_7 = arith.constant 64 : i32
      %16 = arith.muli %c0_i32_6, %c64_i32_7 : i32
      %17 = tpu.assume_multiple %16, 64 : i32
      %18 = arith.index_cast %17 : i32 to index
      %c0 = arith.constant 0 : index
      %19 = vector.load %arg4[%18, %c0] : memref<64x128xf32, #tpu.memory_space<vmem>>, vector<64x128xf32>
      %20 = arith.index_cast %17 : i32 to index
      %c0_8 = arith.constant 0 : index
      %21 = vector.load %arg2[%20, %c0_8] : memref<64x128xf32, #tpu.memory_space<vmem>>, vector<64x128xf32>
      %22 = arith.subf %21, %19 : vector<64x128xf32>
      %23 = arith.mulf %22, %22 : vector<64x128xf32>
      %24 = arith.index_cast %17 : i32 to index
      %c0_9 = arith.constant 0 : index
      %25 = vector.load %arg3[%24, %c0_9] : memref<64x128xf32, #tpu.memory_space<vmem>>, vector<64x128xf32>
      %26 = arith.subf %25, %19 : vector<64x128xf32>
      %27 = arith.mulf %26, %26 : vector<64x128xf32>
      %28 = arith.addf %23, %27 : vector<64x128xf32>
      %29 = arith.addi %5, %17 : i32
      %30 = vector.broadcast %29 : i32 to vector<64x128xi32>
      %31 = arith.addi %30, %14 : vector<64x128xi32>
      %c64_i32_10 = arith.constant 64 : i32
      %32 = vector.broadcast %c64_i32_10 : i32 to vector<64x128xi32>
      %33 = arith.cmpi slt, %31, %32 : vector<64x128xi32>
      %cst_11 = arith.constant 0.000000e+00 : f32
      %34 = vector.broadcast %cst_11 : f32 to vector<64x128xf32>
      %35 = arith.select %33, %28, %34 : vector<64x128xi1>, vector<64x128xf32>
      %36 = arith.addf %15, %35 : vector<64x128xf32>
      %c1_i32_12 = arith.constant 1 : i32
      %c0_13 = arith.constant 0 : index
      %c0_14 = arith.constant 0 : index
      %c0_15 = arith.constant 0 : index
      %37 = vector.load %arg5[%c0_13, %c0_14, %c0_15] : memref<1x64x128xf32, #tpu.memory_space<vmem>>, vector<1x64x128xf32>
      %38 = vector.shape_cast %37 : vector<1x64x128xf32> to vector<64x128xf32>
      %39 = arith.addf %38, %36 : vector<64x128xf32>
      %c0_16 = arith.constant 0 : index
      %c0_17 = arith.constant 0 : index
      %c0_18 = arith.constant 0 : index
      %40 = vector.load %arg5[%c0_16, %c0_17, %c0_18] : memref<1x64x128xf32, #tpu.memory_space<vmem>>, vector<1x64x128xf32>
      %41 = vector.shape_cast %40 : vector<1x64x128xf32> to vector<64x128xf32>
      %42 = vector.shape_cast %39 : vector<64x128xf32> to vector<1x64x128xf32>
      tpu.vector_store %arg5[%c0_16, %c0_17, %c0_18], %42 {strides = array<i32>} : memref<1x64x128xf32, #tpu.memory_space<vmem>>, vector<1x64x128xf32>,
    } else {
    }
    return
  }
  func.func @transform_0(%arg0: i32, %arg1: i32) -> (i32, i32) {
    %c1_i32 = arith.constant 1 : i32
    %0 = arith.muli %arg0, %c1_i32 : i32
    %1 = arith.addi %0, %arg1 : i32
    %c0_i32 = arith.constant 0 : i32
    %2 = arith.minsi %1, %c0_i32 : i32
    %c0_i32_0 = arith.constant 0 : i32
    %c0_i32_1 = arith.constant 0 : i32
    return %2, %c0_i32_0 : i32, i32
  }
  func.func @transform_1(%arg0: i32, %arg1: i32) -> (i32, i32) {
    %c1_i32 = arith.constant 1 : i32
    %0 = arith.muli %arg0, %c1_i32 : i32
    %1 = arith.addi %0, %arg1 : i32
    %c0_i32 = arith.constant 0 : i32
    %2 = arith.minsi %1, %c0_i32 : i32
    %c0_i32_0 = arith.constant 0 : i32
    %c0_i32_1 = arith.constant 0 : i32
    return %2, %c0_i32_0 : i32, i32
  }
  func.func @transform_2(%arg0: i32, %arg1: i32) -> (i32, i32) {
    %c1_i32 = arith.constant 1 : i32
    %0 = arith.muli %arg0, %c1_i32 : i32
    %1 = arith.addi %0, %arg1 : i32
    %c0_i32 = arith.constant 0 : i32
    %2 = arith.minsi %1, %c0_i32 : i32
    %c0_i32_0 = arith.constant 0 : i32
    %c0_i32_1 = arith.constant 0 : i32
    return %2, %c0_i32_0 : i32, i32
  }
  func.func @transform_3(%arg0: i32, %arg1: i32) -> (i32, i32, i32) {
    %c0_i32 = arith.constant 0 : i32
    %c0_i32_0 = arith.constant 0 : i32
    %c0_i32_1 = arith.constant 0 : i32
    return %arg0, %c0_i32, %c0_i32_0 : i32, i32, i32
  }
}

</mosaic_0001>

<llo_original>
// kernel: tpu_custom_call.1
$region0: #{tpu_custom_call.1}
  #allocation0 [shape = 'u32[]', space=smem, size = 0x4, offset = 0x4, fixed_abs, tag = 'smem constant byte address 0x4 - core index']
  #allocation1 [shape = 'u32[144,128]{1,0:T(1,128)}', space=vmem, size = 0x12000, scoped, tag = 'internal scratch']
  %s0 = inlined_call_operand.hbm [shape: f32[64,128], index: 0, kind: input, shape index: {}]
  %s1 = inlined_call_operand.hbm [shape: f32[64,128], index: 1, kind: input, shape index: {}]
  %s2 = inlined_call_operand.hbm [shape: f32[64,128], index: 2, kind: input, shape index: {}]
  %s3 = inlined_call_operand.hbm [shape: f32[1,64,128], index: 3, kind: output, shape index: {}]
  %s4 = sld [smem:[#allocation0]]
  $region46: #{tpu_custom_call.1} parent=0
    _
  %s6 = ssub.s32 1, %s4
  %s7 = scalar_select 0, %s6, %s4
  $region1: #{tpu_custom_call.1} parent=0
    #allocation2 [shape = 'u8[32768]{0}', space=vmem, size = 0x8000, scoped, tag = 'input window, operand 0, single buffered']
    #allocation3 [shape = 's32[1]{0}', space=sflag, size = 0x4, scoped, tag = 'scoped memory for tpu_custom_call.1']
    #allocation4 [shape = 's32[1]{0}', space=sflag, size = 0x4, scoped, tag = 'scoped memory for tpu_custom_call.1']
    #allocation5 [shape = 'u8[32768]{0}', space=vmem, size = 0x8000, scoped, tag = 'input window, operand 1, single buffered']
    #allocation6 [shape = 's32[1]{0}', space=sflag, size = 0x4, scoped, tag = 'scoped memory for tpu_custom_call.1']
    #allocation7 [shape = 'u8[32768]{0}', space=vmem, size = 0x8000, scoped, tag = 'input window, operand 2, single buffered']
    #allocation8 [shape = 'u8[32768]{0}', space=vmem, size = 0x8000, scoped, tag = 'output window, operand 0, single buffered']
    %8 = vsyncpa [#allocation3], 0
    %9 = vsyncpa [#allocation6], 0
    %10 = vsyncpa [#allocation4], 0
    // Predicated region
    $region2: #{tpu_custom_call.1} parent=1 // pred_check
      _
    $region3: #{tpu_custom_call.1} parent=1 // pred_check_branch
      %12 = sbr.rel (0) target = $region5
    $region4: #{tpu_custom_call.1} parent=1 // pred_region
      %s13 = sadd.s32 0, 0
      %p14 = scmp.lt.s32.totalorder %s13, 0
      %s15 = scalar_select %p14, %s13, 0
      %s16 = smul.u32 8, %s15
      %s18 = ssub.s32 1024, 1024
      %19 = vsyncadd [#allocation3], %s18
      %s20 = smul.addr %s16, 128
      %s21 = scalar_lea.hbm %s0, %s20
      %s22 = sshll.u32 [#allocation2], 4
      %s23 = int_to_ptr.vmem [resolvable:$true] %s22
      %28 = dma.hbm_to_vmem [thread:$0]  %s21, 1024, %s23, [#allocation3], 128, 128, 8
    $region5: #{tpu_custom_call.1} parent=1 // pred_fallthru
      _
    // Predicated region
    $region6: #{tpu_custom_call.1} parent=1 // pred_check
      _
    $region7: #{tpu_custom_call.1} parent=1 // pred_check_branch
      %30 = sbr.rel (0) target = $region9
    $region8: #{tpu_custom_call.1} parent=1 // pred_region
      %s31 = sadd.s32 0, 0
      %p32 = scmp.lt.s32.totalorder %s31, 0
      %s33 = scalar_select %p32, %s31, 0
      %s34 = smul.u32 8, %s33
      %s36 = ssub.s32 1024, 1024
      %37 = vsyncadd [#allocation6], %s36
      %s38 = smul.addr %s34, 128
      %s39 = scalar_lea.hbm %s1, %s38
      %s40 = sshll.u32 [#allocation5], 4
      %s41 = int_to_ptr.vmem [resolvable:$true] %s40
      %46 = dma.hbm_to_vmem [thread:$0]  %s39, 1024, %s41, [#allocation6], 128, 128, 8
    $region9: #{tpu_custom_call.1} parent=1 // pred_fallthru
      _
    // Predicated region
    $region10: #{tpu_custom_call.1} parent=1 // pred_check
      _
    $region11: #{tpu_custom_call.1} parent=1 // pred_check_branch
      %48 = sbr.rel (0) target = $region13
    $region12: #{tpu_custom_call.1} parent=1 // pred_region
      %s49 = sadd.s32 0, 0
      %p50 = scmp.lt.s32.totalorder %s49, 0
      %s51 = scalar_select %p50, %s49, 0
      %s52 = smul.u32 8, %s51
      %s54 = ssub.s32 1024, 1024
      %55 = vsyncadd [#allocation6], %s54
      %s56 = smul.addr %s52, 128
      %s57 = scalar_lea.hbm %s2, %s56
      %s58 = sshll.u32 [#allocation7], 4
      %s59 = int_to_ptr.vmem [resolvable:$true] %s58
      %64 = dma.hbm_to_vmem [thread:$0]  %s57, 1024, %s59, [#allocation6], 128, 128, 8
    $region13: #{tpu_custom_call.1} parent=1 // pred_fallthru
      _
    // Predicated region
    $region14: #{tpu_custom_call.1} parent=1 // pred_check
      _
    $region15: #{tpu_custom_call.1} parent=1 // pred_check_branch
      %66 = sbr.rel (0) target = $region17
    $region16: #{tpu_custom_call.1} parent=1 // pred_region
      %67 = dma.done [#allocation3], 1024
    $region17: #{tpu_custom_call.1} parent=1 // pred_fallthru
      _
    // Predicated region
    $region18: #{tpu_custom_call.1} parent=1 // pred_check
      _
    $region19: #{tpu_custom_call.1} parent=1 // pred_check_branch
      %69 = sbr.rel (0) target = $region21
    $region20: #{tpu_custom_call.1} parent=1 // pred_region
      %70 = dma.done [#allocation6], 1024
    $region21: #{tpu_custom_call.1} parent=1 // pred_fallthru
      _
    // Predicated region
    $region22: #{tpu_custom_call.1} parent=1 // pred_check
      _
    $region23: #{tpu_custom_call.1} parent=1 // pred_check_branch
      %72 = sbr.rel (0) target = $region25
    $region24: #{tpu_custom_call.1} parent=1 // pred_region
      %73 = dma.done [#allocation6], 1024
    $region25: #{tpu_custom_call.1} parent=1 // pred_fallthru
      _
    %s74 = sadd.s32 0, 0
    %p75 = scmp.lt.s32.totalorder %s74, 0
    %s76 = scalar_select %p75, %s74, 0
    %s77 = smul.u32 8, %s76
    %s78 = sadd.s32 0, 0
    %p79 = scmp.lt.s32.totalorder %s78, 0
    %s80 = scalar_select %p79, %s78, 0
    %s81 = smul.u32 8, %s80
    %s82 = sadd.s32 0, 0
    %p83 = scmp.lt.s32.totalorder %s82, 0
    %s84 = scalar_select %p83, %s82, 0
    %s85 = smul.u32 8, %s84
    %p86 = scmp.eq.s32.totalorder 0, 0
    // Predicated region
    $region26: #{tpu_custom_call.1} parent=1 // pred_check
      %p87 = pneg %p86
    $region27: #{tpu_custom_call.1} parent=1 // pred_check_branch
      %89 = sbr.rel (%p87) target = $region29
    $region28: #{tpu_custom_call.1} parent=1 // pred_region
      %90 = vst [vmem:[#allocation8] sm:$0xff] 0.0
      %91 = vst [vmem:[#allocation8 + $0x8] sm:$0xff] 0.0
      %92 = vst [vmem:[#allocation8 + $0x10] sm:$0xff] 0.0
      %93 = vst [vmem:[#allocation8 + $0x18] sm:$0xff] 0.0
      %94 = vst [vmem:[#allocation8 + $0x20] sm:$0xff] 0.0
      %95 = vst [vmem:[#allocation8 + $0x28] sm:$0xff] 0.0
      %96 = vst [vmem:[#allocation8 + $0x30] sm:$0xff] 0.0
      %97 = vst [vmem:[#allocation8 + $0x38] sm:$0xff] 0.0
    $region29: #{tpu_custom_call.1} parent=1 // pred_fallthru
      _
    %s98 = sadd.s32 0, 0
    %s99 = smul.u32 %s98, 64
    %s100 = sadd.s32 %s98, 1
    %s101 = smul.u32 %s100, 64
    %p102 = scmp.le.s32.totalorder %s101, 64
    // Predicated region
    $region30: #{tpu_custom_call.1} parent=1 // pred_check
      %p103 = pneg %p102
    $region31: #{tpu_custom_call.1} parent=1 // pred_check_branch
      %105 = sbr.rel (%p103) target = $region33
    $region32: #{tpu_custom_call.1} parent=1 // pred_region
      %v106 = vld [vmem:[#allocation7] sm:$0xff]
      %v107 = vld [vmem:[#allocation7 + $0x8] sm:$0xff]
      %v108 = vld [vmem:[#allocation7 + $0x10] sm:$0xff]
      %v109 = vld [vmem:[#allocation7 + $0x18] sm:$0xff]
      %v110 = vld [vmem:[#allocation7 + $0x20] sm:$0xff]
      %v111 = vld [vmem:[#allocation7 + $0x28] sm:$0xff]
      %v112 = vld [vmem:[#allocation7 + $0x30] sm:$0xff]
      %v113 = vld [vmem:[#allocation7 + $0x38] sm:$0xff]
      %v114 = vld [vmem:[#allocation2] sm:$0xff]
      %v115 = vld [vmem:[#allocation2 + $0x8] sm:$0xff]
      %v116 = vld [vmem:[#allocation2 + $0x10] sm:$0xff]
      %v117 = vld [vmem:[#allocation2 + $0x18] sm:$0xff]
      %v118 = vld [vmem:[#allocation2 + $0x20] sm:$0xff]
      %v119 = vld [vmem:[#allocation2 + $0x28] sm:$0xff]
      %v120 = vld [vmem:[#allocation2 + $0x30] sm:$0xff]
      %v121 = vld [vmem:[#allocation2 + $0x38] sm:$0xff]
      %v122 = vsub.f32 %v114, %v106
      %v123 = vsub.f32 %v115, %v107
      %v124 = vsub.f32 %v116, %v108
      %v125 = vsub.f32 %v117, %v109
      %v126 = vsub.f32 %v118, %v110
      %v127 = vsub.f32 %v119, %v111
      %v128 = vsub.f32 %v120, %v112
      %v129 = vsub.f32 %v121, %v113
      %v130 = vmul.f32 %v122, %v122
      %v131 = vmul.f32 %v123, %v123
      %v132 = vmul.f32 %v124, %v124
      %v133 = vmul.f32 %v125, %v125
      %v134 = vmul.f32 %v126, %v126
      %v135 = vmul.f32 %v127, %v127
      %v136 = vmul.f32 %v128, %v128
      %v137 = vmul.f32 %v129, %v129
      %v138 = vld [vmem:[#allocation5] sm:$0xff]
      %v139 = vld [vmem:[#allocation5 + $0x8] sm:$0xff]
      %v140 = vld [vmem:[#allocation5 + $0x10] sm:$0xff]
      %v141 = vld [vmem:[#allocation5 + $0x18] sm:$0xff]
      %v142 = vld [vmem:[#allocation5 + $0x20] sm:$0xff]
      %v143 = vld [vmem:[#allocation5 + $0x28] sm:$0xff]
      %v144 = vld [vmem:[#allocation5 + $0x30] sm:$0xff]
      %v145 = vld [vmem:[#allocation5 + $0x38] sm:$0xff]
      %v146 = vsub.f32 %v138, %v106
      %v147 = vsub.f32 %v139, %v107
      %v148 = vsub.f32 %v140, %v108
      %v149 = vsub.f32 %v141, %v109
      %v150 = vsub.f32 %v142, %v110
      %v151 = vsub.f32 %v143, %v111
      %v152 = vsub.f32 %v144, %v112
      %v153 = vsub.f32 %v145, %v113
      %v154 = vmul.f32 %v146, %v146
      %v155 = vmul.f32 %v147, %v147
      %v156 = vmul.f32 %v148, %v148
      %v157 = vmul.f32 %v149, %v149
      %v158 = vmul.f32 %v150, %v150
      %v159 = vmul.f32 %v151, %v151
      %v160 = vmul.f32 %v152, %v152
      %v161 = vmul.f32 %v153, %v153
      %v162 = vadd.f32 %v130, %v154
      %v163 = vadd.f32 %v131, %v155
      %v164 = vadd.f32 %v132, %v156
      %v165 = vadd.f32 %v133, %v157
      %v166 = vadd.f32 %v134, %v158
      %v167 = vadd.f32 %v135, %v159
      %v168 = vadd.f32 %v136, %v160
      %v169 = vadd.f32 %v137, %v161
      %v170 = vadd.f32 %v162, 0.0
      %v171 = vadd.f32 %v163, 0.0
      %v172 = vadd.f32 %v164, 0.0
      %v173 = vadd.f32 %v165, 0.0
      %v174 = vadd.f32 %v166, 0.0
      %v175 = vadd.f32 %v167, 0.0
      %v176 = vadd.f32 %v168, 0.0
      %v177 = vadd.f32 %v169, 0.0
      %v178 = vld [vmem:[#allocation8] sm:$0xff]
      %v179 = vld [vmem:[#allocation8 + $0x8] sm:$0xff]
      %v180 = vld [vmem:[#allocation8 + $0x10] sm:$0xff]
      %v181 = vld [vmem:[#allocation8 + $0x18] sm:$0xff]
      %v182 = vld [vmem:[#allocation8 + $0x20] sm:$0xff]
      %v183 = vld [vmem:[#allocation8 + $0x28] sm:$0xff]
      %v184 = vld [vmem:[#allocation8 + $0x30] sm:$0xff]
      %v185 = vld [vmem:[#allocation8 + $0x38] sm:$0xff]
      %v186 = vadd.f32 %v178, %v170
      %v187 = vadd.f32 %v179, %v171
      %v188 = vadd.f32 %v180, %v172
      %v189 = vadd.f32 %v181, %v173
      %v190 = vadd.f32 %v182, %v174
      %v191 = vadd.f32 %v183, %v175
      %v192 = vadd.f32 %v184, %v176
      %v193 = vadd.f32 %v185, %v177
      %194 = vst [vmem:[#allocation8] sm:$0xff] %v186
      %195 = vst [vmem:[#allocation8 + $0x8] sm:$0xff] %v187
      %196 = vst [vmem:[#allocation8 + $0x10] sm:$0xff] %v188
      %197 = vst [vmem:[#allocation8 + $0x18] sm:$0xff] %v189
      %198 = vst [vmem:[#allocation8 + $0x20] sm:$0xff] %v190
      %199 = vst [vmem:[#allocation8 + $0x28] sm:$0xff] %v191
      %200 = vst [vmem:[#allocation8 + $0x30] sm:$0xff] %v192
      %201 = vst [vmem:[#allocation8 + $0x38] sm:$0xff] %v193
    $region33: #{tpu_custom_call.1} parent=1 // pred_fallthru
      _
    %p202 = scmp.gt.s32.totalorder %s101, 64
    // Predicated region
    $region34: #{tpu_custom_call.1} parent=1 // pred_check
      %p203 = pneg %p202
    $region35: #{tpu_custom_call.1} parent=1 // pred_check_branch
      %205 = sbr.rel (%p203) target = $region37
    $region36: #{tpu_custom_call.1} parent=1 // pred_region
      %v206 = vlaneseq
      %v207 = vshrl.u32 %v206, 7
      %v208 = vadd.s32 %v207, 8
      %v209 = vadd.s32 %v207, 16
      %v210 = vadd.s32 %v207, 24
      %v211 = vadd.s32 %v207, 32
      %v212 = vadd.s32 %v207, 40
      %v213 = vadd.s32 %v207, 48
      %v214 = vadd.s32 %v207, 56
      %v215 = vld [vmem:[#allocation7] sm:$0xff]
      %v216 = vld [vmem:[#allocation7 + $0x8] sm:$0xff]
      %v217 = vld [vmem:[#allocation7 + $0x10] sm:$0xff]
      %v218 = vld [vmem:[#allocation7 + $0x18] sm:$0xff]
      %v219 = vld [vmem:[#allocation7 + $0x20] sm:$0xff]
      %v220 = vld [vmem:[#allocation7 + $0x28] sm:$0xff]
      %v221 = vld [vmem:[#allocation7 + $0x30] sm:$0xff]
      %v222 = vld [vmem:[#allocation7 + $0x38] sm:$0xff]
      %v223 = vld [vmem:[#allocation2] sm:$0xff]
      %v224 = vld [vmem:[#allocation2 + $0x8] sm:$0xff]
      %v225 = vld [vmem:[#allocation2 + $0x10] sm:$0xff]
      %v226 = vld [vmem:[#allocation2 + $0x18] sm:$0xff]
      %v227 = vld [vmem:[#allocation2 + $0x20] sm:$0xff]
      %v228 = vld [vmem:[#allocation2 + $0x28] sm:$0xff]
      %v229 = vld [vmem:[#allocation2 + $0x30] sm:$0xff]
      %v230 = vld [vmem:[#allocation2 + $0x38] sm:$0xff]
      %v231 = vsub.f32 %v223, %v215
      %v232 = vsub.f32 %v224, %v216
      %v233 = vsub.f32 %v225, %v217
      %v234 = vsub.f32 %v226, %v218
      %v235 = vsub.f32 %v227, %v219
      %v236 = vsub.f32 %v228, %v220
      %v237 = vsub.f32 %v229, %v221
      %v238 = vsub.f32 %v230, %v222
      %v239 = vmul.f32 %v231, %v231
      %v240 = vmul.f32 %v232, %v232
      %v241 = vmul.f32 %v233, %v233
      %v242 = vmul.f32 %v234, %v234
      %v243 = vmul.f32 %v235, %v235
      %v244 = vmul.f32 %v236, %v236
      %v245 = vmul.f32 %v237, %v237
      %v246 = vmul.f32 %v238, %v238
      %v247 = vld [vmem:[#allocation5] sm:$0xff]
      %v248 = vld [vmem:[#allocation5 + $0x8] sm:$0xff]
      %v249 = vld [vmem:[#allocation5 + $0x10] sm:$0xff]
      %v250 = vld [vmem:[#allocation5 + $0x18] sm:$0xff]
      %v251 = vld [vmem:[#allocation5 + $0x20] sm:$0xff]
      %v252 = vld [vmem:[#allocation5 + $0x28] sm:$0xff]
      %v253 = vld [vmem:[#allocation5 + $0x30] sm:$0xff]
      %v254 = vld [vmem:[#allocation5 + $0x38] sm:$0xff]
      %v255 = vsub.f32 %v247, %v215
      %v256 = vsub.f32 %v248, %v216
      %v257 = vsub.f32 %v249, %v217
      %v258 = vsub.f32 %v250, %v218
      %v259 = vsub.f32 %v251, %v219
      %v260 = vsub.f32 %v252, %v220
      %v261 = vsub.f32 %v253, %v221
      %v262 = vsub.f32 %v254, %v222
      %v263 = vmul.f32 %v255, %v255
      %v264 = vmul.f32 %v256, %v256
      %v265 = vmul.f32 %v257, %v257
      %v266 = vmul.f32 %v258, %v258
      %v267 = vmul.f32 %v259, %v259
      %v268 = vmul.f32 %v260, %v260
      %v269 = vmul.f32 %v261, %v261
      %v270 = vmul.f32 %v262, %v262
      %v271 = vadd.f32 %v239, %v263
      %v272 = vadd.f32 %v240, %v264
      %v273 = vadd.f32 %v241, %v265
      %v274 = vadd.f32 %v242, %v266
      %v275 = vadd.f32 %v243, %v267
      %v276 = vadd.f32 %v244, %v268
      %v277 = vadd.f32 %v245, %v269
      %v278 = vadd.f32 %v246, %v270
      %s279 = sadd.s32 %s99, 0
      %v280 = vstv %s279
      %v281 = vadd.s32 %v280, %v207
      %v282 = vadd.s32 %v280, %v208
      %v283 = vadd.s32 %v280, %v209
      %v284 = vadd.s32 %v280, %v210
      %v285 = vadd.s32 %v280, %v211
      %v286 = vadd.s32 %v280, %v212
      %v287 = vadd.s32 %v280, %v213
      %v288 = vadd.s32 %v280, %v214
      %vm289 = vcmp.lt.s32.totalorder %v281, 64
      %vm290 = vcmp.lt.s32.totalorder %v282, 64
      %vm291 = vcmp.lt.s32.totalorder %v283, 64
      %vm292 = vcmp.lt.s32.totalorder %v284, 64
      %vm293 = vcmp.lt.s32.totalorder %v285, 64
      %vm294 = vcmp.lt.s32.totalorder %v286, 64
      %vm295 = vcmp.lt.s32.totalorder %v287, 64
      %vm296 = vcmp.lt.s32.totalorder %v288, 64
      %v297 = vsel %vm289, %v271, 0.0
      %v298 = vsel %vm290, %v272, 0.0
      %v299 = vsel %vm291, %v273, 0.0
      %v300 = vsel %vm292, %v274, 0.0
      %v301 = vsel %vm293, %v275, 0.0
      %v302 = vsel %vm294, %v276, 0.0
      %v303 = vsel %vm295, %v277, 0.0
      %v304 = vsel %vm296, %v278, 0.0
      %v305 = vadd.f32 %v297, 0.0
      %v306 = vadd.f32 %v298, 0.0
      %v307 = vadd.f32 %v299, 0.0
      %v308 = vadd.f32 %v300, 0.0
      %v309 = vadd.f32 %v301, 0.0
      %v310 = vadd.f32 %v302, 0.0
      %v311 = vadd.f32 %v303, 0.0
      %v312 = vadd.f32 %v304, 0.0
      %v313 = vld [vmem:[#allocation8] sm:$0xff]
      %v314 = vld [vmem:[#allocation8 + $0x8] sm:$0xff]
      %v315 = vld [vmem:[#allocation8 + $0x10] sm:$0xff]
      %v316 = vld [vmem:[#allocation8 + $0x18] sm:$0xff]
      %v317 = vld [vmem:[#allocation8 + $0x20] sm:$0xff]
      %v318 = vld [vmem:[#allocation8 + $0x28] sm:$0xff]
      %v319 = vld [vmem:[#allocation8 + $0x30] sm:$0xff]
      %v320 = vld [vmem:[#allocation8 + $0x38] sm:$0xff]
      %v321 = vadd.f32 %v313, %v305
      %v322 = vadd.f32 %v314, %v306
      %v323 = vadd.f32 %v315, %v307
      %v324 = vadd.f32 %v316, %v308
      %v325 = vadd.f32 %v317, %v309
      %v326 = vadd.f32 %v318, %v310
      %v327 = vadd.f32 %v319, %v311
      %v328 = vadd.f32 %v320, %v312
      %329 = vst [vmem:[#allocation8] sm:$0xff] %v321
      %330 = vst [vmem:[#allocation8 + $0x8] sm:$0xff] %v322
      %331 = vst [vmem:[#allocation8 + $0x10] sm:$0xff] %v323
      %332 = vst [vmem:[#allocation8 + $0x18] sm:$0xff] %v324
      %333 = vst [vmem:[#allocation8 + $0x20] sm:$0xff] %v325
      %334 = vst [vmem:[#allocation8 + $0x28] sm:$0xff] %v326
      %335 = vst [vmem:[#allocation8 + $0x30] sm:$0xff] %v327
      %336 = vst [vmem:[#allocation8 + $0x38] sm:$0xff] %v328
    $region37: #{tpu_custom_call.1} parent=1 // pred_fallthru
      _
    // Predicated region
    $region38: #{tpu_custom_call.1} parent=1 // pred_check
      _
    $region39: #{tpu_custom_call.1} parent=1 // pred_check_branch
      %338 = sbr.rel (0) target = $region41
    $region40: #{tpu_custom_call.1} parent=1 // pred_region
      %s340 = ssub.s32 1024, 1024
      %341 = vsyncadd [#allocation4], %s340
      %s342 = sshll.u32 [#allocation8], 4
      %s343 = int_to_ptr.vmem [resolvable:$true] %s342
      %348 = dma.vmem_to_hbm [thread:$0]  %s343, 1024, %s3, [#allocation4], 128, 128, 8
    $region41: #{tpu_custom_call.1} parent=1 // pred_fallthru
      _
    // Predicated region
    $region42: #{tpu_custom_call.1} parent=1 // pred_check
      _
    $region43: #{tpu_custom_call.1} parent=1 // pred_check_branch
      %350 = sbr.rel (0) target = $region45
    $region44: #{tpu_custom_call.1} parent=1 // pred_region
      %351 = dma.done [#allocation4], 1024
    $region45: #{tpu_custom_call.1} parent=1 // pred_fallthru
      _
    %352 = vsyncpa [#allocation3], 1
    %353 = vsyncpa [#allocation6], 1
    %354 = vsyncpa [#allocation4], 1

</llo_original>
